<compile_context>
chip_gen: v6e
topology: v6e:2x2x1
jax: 0.10.0
libtpu: 0.0.40
codegen_flags: <defaults>
</compile_context>

<pallas_src>
import functools

import jax
import jax.numpy as jnp
from jax.experimental import pallas as pl
from jax.experimental.pallas import tpu as pltpu


def qnet_kernel(x_ref, w1_ref, b1_ref, w2_ref, b2_ref, out_ref):
    # fc1: (TB, I) @ (I, H) -> f32 accum on the MXU; bias + ReLU in f32 (VPU).
    h = jnp.dot(x_ref[...], w1_ref[...], preferred_element_type=jnp.float32)
    h = jnp.maximum(h + b1_ref[...], 0.0)
    # fc3: (TB, H) @ (H, O) -> f32 accum; cast h to W2's dtype (no-op for f32).
    out = jnp.dot(h.astype(w2_ref.dtype), w2_ref[...],
                  preferred_element_type=jnp.float32)
    out_ref[...] = (out + b2_ref[...]).astype(out_ref.dtype)


def _round_up(n, m):
    return pl.cdiv(n, m) * m


def _choose_batch_tiling(B, sublane, max_tile):
    """Pick (TB, B_pad): TB a sublane multiple (or == B for tiny batches),
    B_pad a multiple of TB, minimizing padded rows; >= 2 grid steps for big B."""
    if B <= sublane:
        return B, B                  # block dim == array dim -> legal, no padding
    max_tile = max(max_tile, sublane)
    upper = min(max_tile, _round_up(B, sublane))
    if B >= 512:
        # Keep at least 2 grid steps so the batch axis can shard across the
        # two TensorCores on v7x (no-op on v5e/v6e).
        upper = min(upper, _round_up(pl.cdiv(B, 2), sublane))
    best_tb, best_waste = sublane, _round_up(B, sublane) - B
    for tb in range(sublane, upper + 1, sublane):
        waste = _round_up(B, tb) - B
        if waste < best_waste or (waste == best_waste and tb > best_tb):
            best_tb, best_waste = tb, waste
    return best_tb, _round_up(B, best_tb)


def prepare_qnet_params(w1, b1, w2, b2, matmul_dtype=jnp.float32):
    """One-time parameter prep (call at init / after optimizer steps, NOT per
    forward): cast matmul operands to `matmul_dtype` (bf16 halves the weight
    stream and hits the bf16 MXU fast path on v5e/v6e/v7x); biases stay f32."""
    return (w1.astype(matmul_dtype), b1.astype(jnp.float32),
            w2.astype(matmul_dtype), b2.astype(jnp.float32))


@functools.partial(jax.jit, static_argnames=("block_b",))
def qnet_forward(x, w1, b1, w2, b2, *, block_b=1024):
    """relu(x @ w1 + b1) @ w2 + b2; w_i stored (in, out), b_i stored (1, out)."""
    B, I = x.shape
    H = w1.shape[1]
    O = w2.shape[1]

    mm_dtype = w1.dtype
    # bf16 packs two rows per sublane -> 16-row tile granularity for bf16.
    sublane = 16 if mm_dtype == jnp.bfloat16 else 8
    TB, B_p = _choose_batch_tiling(B, sublane, block_b)

    xp = x.astype(mm_dtype)
    if B_p != B:
        xp = jnp.zeros((B_p, I), mm_dtype).at[:B, :].set(xp)

    grid = (B_p // TB,)

    # Cost estimate from logical dims; weights/biases are DMA'd once (resident).
    itm = jnp.dtype(mm_dtype).itemsize
    flops = 2 * B_p * (I * H + H * O)
    bytes_accessed = (B_p * I * itm                          # x (streamed)
                      + (I * H + H * O) * itm + (H + O) * 4  # weights+biases once
                      + B_p * O * 4)                         # out (streamed)

    out_p = pl.pallas_call(
        qnet_kernel,
        out_shape=jax.ShapeDtypeStruct((B_p, O), jnp.float32),
        grid=grid,
        in_specs=[
            pl.BlockSpec((TB, I), lambda i: (i, 0)),   # x: streamed by batch tile
            pl.BlockSpec((I, H), lambda i: (0, 0)),    # W1: resident in VMEM
            pl.BlockSpec((1, H), lambda i: (0, 0)),    # b1: resident
            pl.BlockSpec((H, O), lambda i: (0, 0)),    # W2: resident
            pl.BlockSpec((1, O), lambda i: (0, 0)),    # b2: resident
        ],
        out_specs=pl.BlockSpec((TB, O), lambda i: (i, 0)),
        compiler_params=pltpu.CompilerParams(
            dimension_semantics=("parallel",),  # batch tiles shard over v7x's 2 TCs
        ),
        cost_estimate=pl.CostEstimate(
            flops=flops, transcendentals=0, bytes_accessed=bytes_accessed),
    )(xp, w1, b1, w2, b2)

    return out_p if B_p == B else out_p[:B]


def init_linear_params(key, in_features, out_features):
    # PyTorch nn.Linear default init: U(-1/sqrt(fan_in), +1/sqrt(fan_in)).
    kw, kb = jax.random.split(key)
    bound = 1.0 / jnp.sqrt(float(in_features))
    w = jax.random.uniform(kw, (in_features, out_features),
                           minval=-bound, maxval=bound, dtype=jnp.float32)
    b = jax.random.uniform(kb, (1, out_features),
                           minval=-bound, maxval=bound, dtype=jnp.float32)
    return w, b


if __name__ == "__main__":
    # Small DQN-ish shapes: 8-dim observation, 32 hidden units, 4 actions.
    batch, input_size, hidden_size, output_size = 2, 8, 32, 4

    key = jax.random.PRNGKey(0)
    k_x, k_fc1, k_fc3, k_big = jax.random.split(key, 4)

    x = jax.random.normal(k_x, (batch, input_size), dtype=jnp.float32)
    w1, b1 = init_linear_params(k_fc1, input_size, hidden_size)
    w2, b2 = init_linear_params(k_fc3, hidden_size, output_size)

    def ref_fn(xx):
        return jnp.maximum(xx @ w1 + b1, 0.0) @ w2 + b2

    # f32 path (exact), tiny batch -> single (2, 8) tile, zero padding.
    p_f32 = prepare_qnet_params(w1, b1, w2, b2, jnp.float32)
    out = jax.block_until_ready(qnet_forward(x, *p_f32))
    assert out.shape == (batch, output_size)
    assert jnp.allclose(out, ref_fn(x), atol=1e-5, rtol=1e-5)

    # f32 path, replay-buffer-sized batch -> multi-tile streamed grid (3 steps).
    x_big = jax.random.normal(k_big, (600, input_size), dtype=jnp.float32)
    out_big = jax.block_until_ready(qnet_forward(x_big, *p_f32))
    assert out_big.shape == (600, output_size)
    assert jnp.allclose(out_big, ref_fn(x_big), atol=1e-4, rtol=1e-4)

    # bf16 matmul-operand path (bf16 MXU on v5e/v6e/v7x): loose tolerance.
    p_bf16 = prepare_qnet_params(w1, b1, w2, b2, jnp.bfloat16)
    out_bf16 = jax.block_until_ready(qnet_forward(x, *p_bf16))
    assert out_bf16.shape == (batch, output_size)
    assert bool(jnp.all(jnp.isfinite(out_bf16)))
    assert jnp.allclose(out_bf16, ref_fn(x), atol=5e-2, rtol=5e-2)

    print("KERNEL_OK")
</pallas_src>

<mosaic_0001>
module attributes {stable_mosaic.version = 11 : i64} {
  func.func @qnet_kernel(%arg0: i32, %arg1: memref<2x8xf32, #tpu.memory_space<vmem>>, %arg2: memref<8x32xf32, #tpu.memory_space<vmem>>, %arg3: memref<1x32xf32, #tpu.memory_space<vmem>>, %arg4: memref<32x4xf32, #tpu.memory_space<vmem>>, %arg5: memref<1x4xf32, #tpu.memory_space<vmem>>, %arg6: memref<2x4xf32, #tpu.memory_space<vmem>>) attributes {dimension_semantics = [#tpu.dimension_semantics<parallel>], iteration_bounds = array<i64: 1>, scalar_prefetch = 0 : i64, scratch_operands = 0 : i64, tpu.core_type = #tpu.core_type<tc>, window_params = [{transform_indices = @transform_0, window_bounds = array<i64: 2, 8>}, {pipeline_mode = #tpu.pipeline_mode<synchronous>, transform_indices = @transform_1, window_bounds = array<i64: 8, 32>}, {pipeline_mode = #tpu.pipeline_mode<synchronous>, transform_indices = @transform_2, window_bounds = array<i64: 1, 32>}, {pipeline_mode = #tpu.pipeline_mode<synchronous>, transform_indices = @transform_3, window_bounds = array<i64: 32, 4>}, {pipeline_mode = #tpu.pipeline_mode<synchronous>, transform_indices = @transform_4, window_bounds = array<i64: 1, 4>}, {transform_indices = @transform_5, window_bounds = array<i64: 2, 4>}]} {
    %c0 = arith.constant 0 : index
    %c0_0 = arith.constant 0 : index
    %0 = vector.load %arg1[%c0, %c0_0] : memref<2x8xf32, #tpu.memory_space<vmem>>, vector<2x8xf32>
    %c0_1 = arith.constant 0 : index
    %c0_2 = arith.constant 0 : index
    %1 = vector.load %arg2[%c0_1, %c0_2] : memref<8x32xf32, #tpu.memory_space<vmem>>, vector<8x32xf32>
    %cst = arith.constant dense<0.000000e+00> : vector<2x32xf32>
    %2 = tpu.matmul %0, %1, %cst {dimension_numbers = #tpu.dot_dimension_numbers<[1], [0], [0], [1], [0, 0, 1, 1], [], []>} : vector<2x8xf32>, vector<8x32xf32>, vector<2x32xf32> -> vector<2x32xf32>
    %c0_3 = arith.constant 0 : index
    %c0_4 = arith.constant 0 : index
    %3 = vector.load %arg3[%c0_3, %c0_4] : memref<1x32xf32, #tpu.memory_space<vmem>>, vector<1x32xf32>
    %4 = vector.broadcast %3 : vector<1x32xf32> to vector<2x32xf32>
    %5 = arith.addf %2, %4 : vector<2x32xf32>
    %cst_5 = arith.constant 0.000000e+00 : f32
    %6 = vector.broadcast %cst_5 : f32 to vector<2x32xf32>
    %7 = arith.maximumf %5, %6 : vector<2x32xf32>
    %c0_6 = arith.constant 0 : index
    %c0_7 = arith.constant 0 : index
    %8 = vector.load %arg4[%c0_6, %c0_7] : memref<32x4xf32, #tpu.memory_space<vmem>>, vector<32x4xf32>
    %cst_8 = arith.constant dense<0.000000e+00> : vector<2x4xf32>
    %9 = tpu.matmul %7, %8, %cst_8 {dimension_numbers = #tpu.dot_dimension_numbers<[1], [0], [0], [1], [0, 0, 1, 1], [], []>} : vector<2x32xf32>, vector<32x4xf32>, vector<2x4xf32> -> vector<2x4xf32>
    %c0_9 = arith.constant 0 : index
    %c0_10 = arith.constant 0 : index
    %10 = vector.load %arg5[%c0_9, %c0_10] : memref<1x4xf32, #tpu.memory_space<vmem>>, vector<1x4xf32>
    %11 = vector.broadcast %10 : vector<1x4xf32> to vector<2x4xf32>
    %12 = arith.addf %9, %11 : vector<2x4xf32>
    %c0_11 = arith.constant 0 : index
    %c0_12 = arith.constant 0 : index
    %13 = vector.load %arg6[%c0_11, %c0_12] : memref<2x4xf32, #tpu.memory_space<vmem>>, vector<2x4xf32>
    tpu.vector_store %arg6[%c0_11, %c0_12], %12 {strides = array<i32>} : memref<2x4xf32, #tpu.memory_space<vmem>>, vector<2x4xf32>,
    return
  }
  func.func @transform_0(%arg0: i32) -> (i32, i32) {
    %c0_i32 = arith.constant 0 : i32
    %c0_i32_0 = arith.constant 0 : i32
    return %arg0, %c0_i32 : i32, i32
  }
  func.func @transform_1(%arg0: i32) -> (i32, i32) {
    %c0_i32 = arith.constant 0 : i32
    %c0_i32_0 = arith.constant 0 : i32
    %c0_i32_1 = arith.constant 0 : i32
    return %c0_i32, %c0_i32_0 : i32, i32
  }
  func.func @transform_2(%arg0: i32) -> (i32, i32) {
    %c0_i32 = arith.constant 0 : i32
    %c0_i32_0 = arith.constant 0 : i32
    %c0_i32_1 = arith.constant 0 : i32
    return %c0_i32, %c0_i32_0 : i32, i32
  }
  func.func @transform_3(%arg0: i32) -> (i32, i32) {
    %c0_i32 = arith.constant 0 : i32
    %c0_i32_0 = arith.constant 0 : i32
    %c0_i32_1 = arith.constant 0 : i32
    return %c0_i32, %c0_i32_0 : i32, i32
  }
  func.func @transform_4(%arg0: i32) -> (i32, i32) {
    %c0_i32 = arith.constant 0 : i32
    %c0_i32_0 = arith.constant 0 : i32
    %c0_i32_1 = arith.constant 0 : i32
    return %c0_i32, %c0_i32_0 : i32, i32
  }
  func.func @transform_5(%arg0: i32) -> (i32, i32) {
    %c0_i32 = arith.constant 0 : i32
    %c0_i32_0 = arith.constant 0 : i32
    return %arg0, %c0_i32 : i32, i32
  }
}

</mosaic_0001>

<llo_original>
// kernel: qnet_forward.1
$region0: #{qnet_forward.1}
  #allocation0 [shape = 'u32[]', space=smem, size = 0x4, offset = 0x4, fixed_abs, tag = 'smem constant byte address 0x4 - core index']
  #allocation1 [shape = 'u32[144,128]{1,0:T(1,128)}', space=vmem, size = 0x12000, scoped, tag = 'internal scratch']
  %s0 = inlined_call_operand.vmem [shape: f32[2,8], index: 0, kind: input, shape index: {}]
  %s1 = inlined_call_operand.vmem [shape: f32[8,32], index: 1, kind: input, shape index: {}]
  %s2 = inlined_call_operand.vmem [shape: f32[1,32], index: 2, kind: input, shape index: {}]
  %s3 = inlined_call_operand.vmem [shape: f32[32,4], index: 3, kind: input, shape index: {}]
  %s4 = inlined_call_operand.vmem [shape: f32[1,4], index: 4, kind: input, shape index: {}]
  %s5 = inlined_call_operand.hbm [shape: f32[2,4], index: 5, kind: output, shape index: {}]
  %s6 = sld [smem:[#allocation0]]
  $region30: #{qnet_forward.1} parent=0
    _
  %s8 = ssub.s32 1, %s6
  %s9 = scalar_select 0, %s8, %s6
  $region1: #{qnet_forward.1} parent=0
    #allocation2 [shape = 'u8[1024]{0}', space=vmem, size = 0x400, scoped, tag = 'output window, operand 0, single buffered']
    #allocation3 [shape = 's32[1]{0}', space=sflag, size = 0x4, scoped, tag = 'scoped memory for qnet_forward.1']
    %10 = vsyncpa [#allocation3], 0
    // Predicated region
    $region2: #{qnet_forward.1} parent=1 // pred_check
      _
    $region3: #{qnet_forward.1} parent=1 // pred_check_branch
      %12 = sbr.rel (0) target = $region5
    $region4: #{qnet_forward.1} parent=1 // pred_region
      _
    $region5: #{qnet_forward.1} parent=1 // pred_fallthru
      _
    // Predicated region
    $region6: #{qnet_forward.1} parent=1 // pred_check
      _
    $region7: #{qnet_forward.1} parent=1 // pred_check_branch
      %14 = sbr.rel (0) target = $region9
    $region8: #{qnet_forward.1} parent=1 // pred_region
      _
    $region9: #{qnet_forward.1} parent=1 // pred_fallthru
      _
    // Predicated region
    $region10: #{qnet_forward.1} parent=1 // pred_check
      _
    $region11: #{qnet_forward.1} parent=1 // pred_check_branch
      %16 = sbr.rel (0) target = $region13
    $region12: #{qnet_forward.1} parent=1 // pred_region
      _
    $region13: #{qnet_forward.1} parent=1 // pred_fallthru
      _
    // Predicated region
    $region14: #{qnet_forward.1} parent=1 // pred_check
      _
    $region15: #{qnet_forward.1} parent=1 // pred_check_branch
      %18 = sbr.rel (0) target = $region17
    $region16: #{qnet_forward.1} parent=1 // pred_region
      _
    $region17: #{qnet_forward.1} parent=1 // pred_fallthru
      _
    // Predicated region
    $region18: #{qnet_forward.1} parent=1 // pred_check
      _
    $region19: #{qnet_forward.1} parent=1 // pred_check_branch
      %20 = sbr.rel (0) target = $region21
    $region20: #{qnet_forward.1} parent=1 // pred_region
      _
    $region21: #{qnet_forward.1} parent=1 // pred_fallthru
      _
    %v21 = vld [vmem:[%s0] sm:$0x3]
    %v22 = vld [vmem:[%s1] sm:$0xff]
    %v23 = vld [vmem:[%s2] sm:$0x1]
    %v25 = vlaneseq
    %v26 = vshrl.u32 %v25, 7
    %v27 = vsub.s32 0, %v26
    %v28 = vrot.slane %v23, %v27
    %vm30 = vcmask 64512
    %v32 = vsel %vm30, %v21, 0
    %34 = vmatprep.subr.mxu0 0.0
    %35 = vmatpush1.msra.mxu0 0.0
    %36 = vmatprep.subr.mxu0 0.0
    %37 = vmatpush1.msra.mxu0 0.0
    %38 = vmatprep.subr.mxu0 0.0
    %39 = vmatpush1.msra.mxu0 0.0
    %40 = vmatprep.subr.mxu0 0.0
    %41 = vmatpush1.msra.mxu0 0.0
    %42 = vmatprep.subr.mxu0 0.0
    %43 = vmatpush1.msra.mxu0 0.0
    %44 = vmatprep.subr.mxu0 0.0
    %45 = vmatpush1.msra.mxu0 0.0
    %46 = vmatprep.subr.mxu0 0.0
    %47 = vmatpush1.msra.mxu0 0.0
    %48 = vmatprep.subr.mxu0 0.0
    %49 = vmatpush1.msra.mxu0 0.0
    %50 = vmatprep.subr.mxu0 0.0
    %51 = vmatpush1.msra.mxu0 0.0
    %52 = vmatprep.subr.mxu0 0.0
    %53 = vmatpush1.msra.mxu0 0.0
    %54 = vmatprep.subr.mxu0 0.0
    %55 = vmatpush1.msra.mxu0 0.0
    %56 = vmatprep.subr.mxu0 0.0
    %57 = vmatpush1.msra.mxu0 0.0
    %58 = vmatprep.subr.mxu0 0.0
    %59 = vmatpush1.msra.mxu0 0.0
    %60 = vmatprep.subr.mxu0 0.0
    %61 = vmatpush1.msra.mxu0 0.0
    %62 = vmatprep.subr.mxu0 0.0
    %63 = vmatpush1.msra.mxu0 0.0
    %64 = vmatprep.subr.mxu0 0.0
    %65 = vmatpush1.msra.mxu0 %v22
    %66 = vmatprep.subr.mxu0 0.0
    %67 = vmatpush2.msra.mxu0 0.0
    %68 = vmatprep.subr.mxu0 0.0
    %69 = vmatpush2.msra.mxu0 0.0
    %70 = vmatprep.subr.mxu0 0.0
    %71 = vmatpush2.msra.mxu0 0.0
    %72 = vmatprep.subr.mxu0 0.0
    %73 = vmatpush2.msra.mxu0 0.0
    %74 = vmatprep.subr.mxu0 0.0
    %75 = vmatpush2.msra.mxu0 0.0
    %76 = vmatprep.subr.mxu0 0.0
    %77 = vmatpush2.msra.mxu0 0.0
    %78 = vmatprep.subr.mxu0 0.0
    %79 = vmatpush2.msra.mxu0 0.0
    %80 = vmatprep.subr.mxu0 0.0
    %81 = vmatpush2.msra.mxu0 0.0
    %82 = vmatprep.subr.mxu0 0.0
    %83 = vmatpush2.msra.mxu0 0.0
    %84 = vmatprep.subr.mxu0 0.0
    %85 = vmatpush2.msra.mxu0 0.0
    %86 = vmatprep.subr.mxu0 0.0
    %87 = vmatpush2.msra.mxu0 0.0
    %88 = vmatprep.subr.mxu0 0.0
    %89 = vmatpush2.msra.mxu0 0.0
    %90 = vmatprep.subr.mxu0 0.0
    %91 = vmatpush2.msra.mxu0 0.0
    %92 = vmatprep.subr.mxu0 0.0
    %93 = vmatpush2.msra.mxu0 0.0
    %94 = vmatprep.subr.mxu0 0.0
    %95 = vmatpush2.msra.mxu0 0.0
    %96 = vmatprep.subr.mxu0 0.0
    %97 = vmatpush2.msra.mxu0 0.0
    %98 = vmatprep.mubr.f32.mxu0 0.0
    %99 = vmatmul.mubr.f32.gmra.mxu0 %v32
    %v100 = vpop.f32.mrf.mxu0
    %v101 = vadd.f32 %v28, %v100
    %v102 = vpop.f32.mrf.mxu0
    %103 = vdwg.mxu0
    %v104 = vmax.f32 %v101, 0.0
    %v105 = vld [vmem:[%s3] sm:$0xff]
    %v106 = vld [vmem:[%s3 + $0x8] sm:$0xff]
    %v107 = vld [vmem:[%s3 + $0x10] sm:$0xff]
    %v108 = vld [vmem:[%s3 + $0x18] sm:$0xff]
    %v109 = vld [vmem:[%s4] sm:$0x1]
    %v111 = vlaneseq
    %v112 = vshrl.u32 %v111, 7
    %v113 = vsub.s32 0, %v112
    %v114 = vrot.slane %v109, %v113
    %vm116 = vcmask 261120
    %v118 = vsel %vm116, %v104, 0
    %120 = vmatprep.subr.mxu0 0.0
    %121 = vmatpush1.msra.mxu0 0.0
    %122 = vmatprep.subr.mxu0 0.0
    %123 = vmatpush1.msra.mxu0 0.0
    %124 = vmatprep.subr.mxu0 0.0
    %125 = vmatpush1.msra.mxu0 0.0
    %126 = vmatprep.subr.mxu0 0.0
    %127 = vmatpush1.msra.mxu0 0.0
    %128 = vmatprep.subr.mxu0 0.0
    %129 = vmatpush1.msra.mxu0 0.0
    %130 = vmatprep.subr.mxu0 0.0
    %131 = vmatpush1.msra.mxu0 0.0
    %132 = vmatprep.subr.mxu0 0.0
    %133 = vmatpush1.msra.mxu0 0.0
    %134 = vmatprep.subr.mxu0 0.0
    %135 = vmatpush1.msra.mxu0 0.0
    %136 = vmatprep.subr.mxu0 0.0
    %137 = vmatpush1.msra.mxu0 0.0
    %138 = vmatprep.subr.mxu0 0.0
    %139 = vmatpush1.msra.mxu0 0.0
    %140 = vmatprep.subr.mxu0 0.0
    %141 = vmatpush1.msra.mxu0 0.0
    %142 = vmatprep.subr.mxu0 0.0
    %143 = vmatpush1.msra.mxu0 0.0
    %144 = vmatprep.subr.mxu0 0.0
    %145 = vmatpush1.msra.mxu0 %v108
    %146 = vmatprep.subr.mxu0 0.0
    %147 = vmatpush1.msra.mxu0 %v107
    %148 = vmatprep.subr.mxu0 0.0
    %149 = vmatpush1.msra.mxu0 %v106
    %150 = vmatprep.subr.mxu0 0.0
    %151 = vmatpush1.msra.mxu0 %v105
    %152 = vmatprep.subr.mxu0 0.0
    %153 = vmatpush2.msra.mxu0 0.0
    %154 = vmatprep.subr.mxu0 0.0
    %155 = vmatpush2.msra.mxu0 0.0
    %156 = vmatprep.subr.mxu0 0.0
    %157 = vmatpush2.msra.mxu0 0.0
    %158 = vmatprep.subr.mxu0 0.0
    %159 = vmatpush2.msra.mxu0 0.0
    %160 = vmatprep.subr.mxu0 0.0
    %161 = vmatpush2.msra.mxu0 0.0
    %162 = vmatprep.subr.mxu0 0.0
    %163 = vmatpush2.msra.mxu0 0.0
    %164 = vmatprep.subr.mxu0 0.0
    %165 = vmatpush2.msra.mxu0 0.0
    %166 = vmatprep.subr.mxu0 0.0
    %167 = vmatpush2.msra.mxu0 0.0
    %168 = vmatprep.subr.mxu0 0.0
    %169 = vmatpush2.msra.mxu0 0.0
    %170 = vmatprep.subr.mxu0 0.0
    %171 = vmatpush2.msra.mxu0 0.0
    %172 = vmatprep.subr.mxu0 0.0
    %173 = vmatpush2.msra.mxu0 0.0
    %174 = vmatprep.subr.mxu0 0.0
    %175 = vmatpush2.msra.mxu0 0.0
    %176 = vmatprep.subr.mxu0 0.0
    %177 = vmatpush2.msra.mxu0 0.0
    %178 = vmatprep.subr.mxu0 0.0
    %179 = vmatpush2.msra.mxu0 0.0
    %180 = vmatprep.subr.mxu0 0.0
    %181 = vmatpush2.msra.mxu0 0.0
    %182 = vmatprep.subr.mxu0 0.0
    %183 = vmatpush2.msra.mxu0 0.0
    %184 = vmatprep.mubr.f32.mxu0 0.0
    %185 = vmatmul.mubr.f32.gmra.mxu0 %v118
    %v186 = vpop.f32.mrf.mxu0
    %v187 = vadd.f32 %v114, %v186
    %v188 = vpop.f32.mrf.mxu0
    %189 = vdwg.mxu0
    %vm190 = vcmask 25600
    %191 = vst.msk [vmem:[#allocation2] sm:$0x3] %vm190, %v187
    // Predicated region
    $region22: #{qnet_forward.1} parent=1 // pred_check
      _
    $region23: #{qnet_forward.1} parent=1 // pred_check_branch
      %193 = sbr.rel (0) target = $region25
    $region24: #{qnet_forward.1} parent=1 // pred_region
      %s195 = ssub.s32 32, 32
      %196 = vsyncadd [#allocation3], %s195
      %s198 = sshll.u32 [#allocation2], 4
      %s199 = int_to_ptr.vmem [resolvable:$true] %s198
      %201 = dma.vmem_to_hbm [thread:$0]  %s199, 32, %s5, [#allocation3]
    $region25: #{qnet_forward.1} parent=1 // pred_fallthru
      _
    // Predicated region
    $region26: #{qnet_forward.1} parent=1 // pred_check
      _
    $region27: #{qnet_forward.1} parent=1 // pred_check_branch
      %203 = sbr.rel (0) target = $region29
    $region28: #{qnet_forward.1} parent=1 // pred_region
      %204 = dma.done [#allocation3], 32
    $region29: #{qnet_forward.1} parent=1 // pred_fallthru
      _
    %205 = vsyncpa [#allocation3], 1

</llo_original>
